<compile_context>
chip_gen: v7x
topology: tpu7x:2x2x1
jax: 0.10.0
libtpu: 0.0.40
codegen_flags: <defaults>
</compile_context>

<pallas_src>
import jax
import jax.numpy as jnp
import numpy as np
from jax.experimental import pallas as pl
from jax.experimental.pallas import tpu as pltpu


def _bert_lexer_kernel(align_ref, hidden_ref, out_ref):
    # align_ref:  (TB, W, L*S)  bf16  — layer-weight-scaled word->subword reduction matrix
    # hidden_ref: (TB, L*S, H)  bf16  — per-sentence stacked hidden layers, contiguous
    # out_ref:    (TB, W, H)    f32   — BERT word embeddings (lane-dense, H % 128 == 0)
    out_ref[...] = jnp.einsum(
        "bwk,bkh->bwh", align_ref[...], hidden_ref[...],
        preferred_element_type=jnp.float32,
    ).astype(out_ref.dtype)


def _choose_sentences_per_step(B, W, LS, H):
    # Per-sentence tile bytes: bf16 hidden + bf16 align + f32 output,
    # double-buffered by the Pallas pipeline.
    per_sent = 2 * ((LS * H) * 2 + (W * LS) * 2 + (W * H) * 4)
    # Conservative budget that fits the v7x 64 MiB VMEM (and the 32 MiB scoped
    # defaults on v5e/v6e) with headroom.
    budget = 16 * 1024 * 1024
    tb_mem = max(1, budget // max(per_sent, 1))
    # Keep at least 2 grid steps when possible so both TensorCores get work.
    tb = max(1, min(tb_mem, B if B < 2 else pl.cdiv(B, 2)))
    return int(tb)


def bert_lexer_forward(layer_weights_eff, hidden_states, align, word_emb):
    """Fused BertLexer forward (eval mode).

    layer_weights_eff: (L,)        effective layer weights (1/L for the default
                                   bert_weighted=False path, gamma*softmax(w) otherwise)
    hidden_states:     (L, B, S, H) stacked selected BERT hidden layers
    align:             (B, W, S)   word->subword reduction matrix ('mean': rows hold
                                   1/span_len on the span, 0 elsewhere; padded words all-zero;
                                   'first': a single 1.0 at the span start)
    word_emb:          (B, W, E)   standard word embeddings (gather done outside)
    returns:           (B, W, E+H) == torch.cat((word_embeddings, bert_embeddings), dim=2)
    """
    L, B, S, H = hidden_states.shape
    _, W, E = word_emb.shape
    LS = L * S

    # ---- wrapper-side layout work (cheap XLA ops) ---------------------------
    # [L, B, S, H] -> [B, L*S, H]: contiguous per-sentence slab for one big DMA.
    hidden_bls = jnp.transpose(hidden_states, (1, 0, 2, 3)).reshape(B, LS, H)
    hidden_bls = hidden_bls.astype(jnp.bfloat16)

    # Fold the layer weights into the alignment matrix:
    #   scaled_align[b, w, l*S + s] = w_l * align[b, w, s]
    scaled_align = (align[:, :, None, :]
                    * layer_weights_eff.astype(align.dtype)[None, None, :, None])
    scaled_align = scaled_align.reshape(B, W, LS).astype(jnp.bfloat16)

    # ---- tiling -------------------------------------------------------------
    TB = _choose_sentences_per_step(B, W, LS, H)
    Bp = pl.cdiv(B, TB) * TB
    if Bp != B:
        pad = Bp - B
        hidden_bls = jnp.pad(hidden_bls, ((0, pad), (0, 0), (0, 0)))
        scaled_align = jnp.pad(scaled_align, ((0, pad), (0, 0), (0, 0)))
    grid = (Bp // TB,)

    tile_bytes = TB * ((LS * H) * 2 + (W * LS) * 2 + (W * H) * 4)
    vmem_limit = int(min(max(2 * tile_bytes + (1 << 20), 16 * 1024 * 1024),
                         64 * 1024 * 1024))

    cost = pl.CostEstimate(
        flops=2 * Bp * W * LS * H,
        transcendentals=0,
        bytes_accessed=int(hidden_bls.size * 2 + scaled_align.size * 2
                           + Bp * W * H * 4),
    )

    bert_word = pl.pallas_call(
        _bert_lexer_kernel,
        out_shape=jax.ShapeDtypeStruct((Bp, W, H), jnp.float32),
        grid_spec=pltpu.PrefetchScalarGridSpec(
            num_scalar_prefetch=0,
            grid=grid,
            in_specs=[
                pl.BlockSpec((TB, W, LS), lambda b: (b, 0, 0)),
                pl.BlockSpec((TB, LS, H), lambda b: (b, 0, 0)),
            ],
            out_specs=pl.BlockSpec((TB, W, H), lambda b: (b, 0, 0)),
        ),
        compiler_params=pltpu.CompilerParams(
            dimension_semantics=("parallel",),
            vmem_limit_bytes=vmem_limit,
        ),
        cost_estimate=cost,
    )(scaled_align, hidden_bls)

    bert_word = bert_word[:B]

    # Feature-dim concat with the standard word embeddings outside the kernel
    # (keeps the kernel output lane-dense; E is typically not a multiple of 128).
    return jnp.concatenate([word_emb.astype(jnp.float32), bert_word], axis=-1)


if __name__ == "__main__":
    # Small shapes consistent with the module's forward; H kept a multiple of 128
    # (lane width), S/W multiples of 8.
    B, W, S = 2, 8, 16          # batch, max words per sentence, max subwords
    E, H, L = 32, 128, 4        # embedding_dim, bert hidden_size, #selected layers
    base_vocab = 10
    vocab_size = base_vocab + 2          # + unk + padding
    unk_idx = base_vocab
    pad_idx = base_vocab + 1

    key = jax.random.PRNGKey(0)
    k_emb, k_hid, k_idx, k_w = jax.random.split(key, 4)

    # Embedding table; padding row is zero (torch.nn.Embedding padding_idx behaviour).
    emb_table = jax.random.normal(k_emb, (vocab_size, E), dtype=jnp.float32)
    emb_table = emb_table.at[pad_idx].set(0.0)

    # Word indices with per-sentence lengths (remaining positions = padding_idx).
    sent_lengths = [8, 6]
    word_indices = np.full((B, W), pad_idx, dtype=np.int32)
    rand_ids = np.asarray(
        jax.random.randint(k_idx, (B, W), 0, base_vocab, dtype=jnp.int32))
    for b, n in enumerate(sent_lengths):
        word_indices[b, :n] = rand_ids[b, :n]
    word_indices = jnp.asarray(word_indices)

    # Glue: embedding lookup (gather) outside the kernel.
    word_emb = jnp.take(emb_table, word_indices, axis=0)        # (B, W, E)

    # Simulated selected BERT hidden states (stack of L layers).
    hidden_states = jax.random.normal(k_hid, (L, B, S, H), dtype=jnp.float32)

    # Deterministic word->subword alignments: subword 0 is [CLS], word w uses
    # 1 + (w % 2) subwords; padded words get an empty (all-zero) row -> zeros
    # in bert_embeddings, matching the `new_zeros` init in the PyTorch forward.
    align = np.zeros((B, W, S), dtype=np.float32)
    for b, n in enumerate(sent_lengths):
        pos = 1                                      # skip [CLS]
        for w in range(n):
            span_len = 1 + (w % 2)
            align[b, w, pos:pos + span_len] = 1.0 / span_len     # 'mean' reduction
            pos += span_len
        assert pos + 1 <= S                          # room for [SEP]
    align = jnp.asarray(align)

    # ---------------- default config: bert_weighted=False -> mean over layers ----
    layer_weights_eff = jnp.full((L,), 1.0 / L, dtype=jnp.float32)

    out = bert_lexer_forward(layer_weights_eff, hidden_states, align, word_emb)
    out = jax.block_until_ready(out)

    # Pure-JAX reference of the PyTorch forward (eval mode), in f32.
    ref_subword = hidden_states.mean(axis=0)                     # (B, S, H)
    ref_bert = jnp.einsum("bws,bsh->bwh", align, ref_subword)    # (B, W, H)
    ref = jnp.concatenate([word_emb, ref_bert], axis=-1)         # (B, W, E+H)

    assert out.shape == (B, W, E + H)
    # Word-embedding half is concatenated in XLA -> exact.
    np.testing.assert_array_equal(np.asarray(out[..., :E]), np.asarray(word_emb))
    # BERT half goes through bf16 inputs (f32 MXU accumulation) -> loose tolerance.
    np.testing.assert_allclose(np.asarray(out[..., E:]), np.asarray(ref[..., E:]),
                               rtol=3e-2, atol=3e-2)

    # ---------------- bert_weighted=True path: gamma * softmax(layer_weights) ----
    raw_w = jax.random.normal(k_w, (L,), dtype=jnp.float32)
    gamma = jnp.float32(1.5)
    lw_eff = gamma * jax.nn.softmax(raw_w)

    out_w = bert_lexer_forward(lw_eff, hidden_states, align, word_emb)
    out_w = jax.block_until_ready(out_w)

    ref_subword_w = jnp.einsum("l,lbsh->bsh", lw_eff, hidden_states)
    ref_bert_w = jnp.einsum("bws,bsh->bwh", align, ref_subword_w)
    np.testing.assert_allclose(np.asarray(out_w[..., E:]), np.asarray(ref_bert_w),
                               rtol=3e-2, atol=3e-2)

    print("KERNEL_OK")
</pallas_src>

<mosaic_0001>
module attributes {stable_mosaic.version = 11 : i64} {
  func.func @_bert_lexer_kernel(%arg0: i32, %arg1: memref<1x8x64xbf16, #tpu.memory_space<vmem>>, %arg2: memref<1x64x128xbf16, #tpu.memory_space<vmem>>, %arg3: memref<1x8x128xf32, #tpu.memory_space<vmem>>) attributes {dimension_semantics = [#tpu.dimension_semantics<parallel>], iteration_bounds = array<i64: 2>, scalar_prefetch = 0 : i64, scratch_operands = 0 : i64, tpu.core_type = #tpu.core_type<tc>, window_params = [{transform_indices = @transform_0, window_bounds = array<i64: 1, 8, 64>}, {transform_indices = @transform_1, window_bounds = array<i64: 1, 64, 128>}, {transform_indices = @transform_2, window_bounds = array<i64: 1, 8, 128>}]} {
    %c0 = arith.constant 0 : index
    %c0_0 = arith.constant 0 : index
    %c0_1 = arith.constant 0 : index
    %0 = vector.load %arg1[%c0, %c0_0, %c0_1] : memref<1x8x64xbf16, #tpu.memory_space<vmem>>, vector<1x8x64xbf16>
    %c0_2 = arith.constant 0 : index
    %c0_3 = arith.constant 0 : index
    %c0_4 = arith.constant 0 : index
    %1 = vector.load %arg2[%c0_2, %c0_3, %c0_4] : memref<1x64x128xbf16, #tpu.memory_space<vmem>>, vector<1x64x128xbf16>
    "tpu.trace_start"() <{level = 10 : i32, message = "bwk,bkh->bwh"}> : () -> ()
    %cst = arith.constant dense<0.000000e+00> : vector<1x8x128xf32>
    %2 = tpu.matmul %0, %1, %cst {dimension_numbers = #tpu.dot_dimension_numbers<[2], [1], [1], [2], [0, 0, 0, 1, 1, 2], [0], [0]>} : vector<1x8x64xbf16>, vector<1x64x128xbf16>, vector<1x8x128xf32> -> vector<1x8x128xf32>
    "tpu.trace_stop"() : () -> ()
    %c0_5 = arith.constant 0 : index
    %c0_6 = arith.constant 0 : index
    %c0_7 = arith.constant 0 : index
    %3 = vector.load %arg3[%c0_5, %c0_6, %c0_7] : memref<1x8x128xf32, #tpu.memory_space<vmem>>, vector<1x8x128xf32>
    tpu.vector_store %arg3[%c0_5, %c0_6, %c0_7], %2 {strides = array<i32>} : memref<1x8x128xf32, #tpu.memory_space<vmem>>, vector<1x8x128xf32>,
    return
  }
  func.func @transform_0(%arg0: i32) -> (i32, i32, i32) {
    %c0_i32 = arith.constant 0 : i32
    %c0_i32_0 = arith.constant 0 : i32
    %c0_i32_1 = arith.constant 0 : i32
    return %arg0, %c0_i32, %c0_i32_0 : i32, i32, i32
  }
  func.func @transform_1(%arg0: i32) -> (i32, i32, i32) {
    %c0_i32 = arith.constant 0 : i32
    %c0_i32_0 = arith.constant 0 : i32
    %c0_i32_1 = arith.constant 0 : i32
    return %arg0, %c0_i32, %c0_i32_0 : i32, i32, i32
  }
  func.func @transform_2(%arg0: i32) -> (i32, i32, i32) {
    %c0_i32 = arith.constant 0 : i32
    %c0_i32_0 = arith.constant 0 : i32
    %c0_i32_1 = arith.constant 0 : i32
    return %arg0, %c0_i32, %c0_i32_0 : i32, i32, i32
  }
}

</mosaic_0001>

<llo_original>
// kernel: tpu_custom_call.1
$region0: #{tpu_custom_call.1}
  #allocation0 [shape = 'u32[]', space=smem, size = 0x4, offset = 0x4, fixed_abs, tag = 'smem constant byte address 0x4 - core index']
  #allocation1 [shape = 'u32[144,128]{1,0:T(1,128)}', space=vmem, size = 0x12000, scoped, tag = 'internal scratch']
  %s0 = inlined_call_operand.hbm [shape: bf16[2,8,64], index: 0, kind: input, shape index: {}]
  %s1 = inlined_call_operand.hbm [shape: bf16[2,64,128], index: 1, kind: input, shape index: {}]
  %s2 = inlined_call_operand.hbm [shape: f32[2,8,128], index: 2, kind: output, shape index: {}]
  %s3 = sld [smem:[#allocation0]]
  $region49: #{tpu_custom_call.1} parent=0
    _
  %s5 = ssub.s32 1, %s3
  %s6 = scalar_select 0, %s5, %s3
  $region1: #{tpu_custom_call.1} parent=0
    #allocation2 [shape = 'u8[4096]{0}', space=vmem, size = 0x1000, scoped, tag = 'input window, operand 0']
    #allocation3 [shape = 's32[2]{0}', space=sflag, size = 0x8, scoped, tag = 'scoped memory for tpu_custom_call.1']
    #allocation4 [shape = 's32[2]{0}', space=sflag, size = 0x8, scoped, tag = 'scoped memory for tpu_custom_call.1']
    #allocation5 [shape = 'u8[32768]{0}', space=vmem, size = 0x8000, scoped, tag = 'input window, operand 1']
    #allocation6 [shape = 's32[2]{0}', space=sflag, size = 0x8, scoped, tag = 'scoped memory for tpu_custom_call.1']
    #allocation7 [shape = 'u8[8192]{0}', space=vmem, size = 0x2000, scoped, tag = 'output window, operand 0']
    %7 = vsyncpa [#allocation3], 0
    %s8 = scalar_lea.sflag [#allocation3], 1
    %9 = vsyncpa %s8, 0
    %10 = vsyncpa [#allocation6], 0
    %s11 = scalar_lea.sflag [#allocation6], 1
    %12 = vsyncpa %s11, 0
    %13 = vsyncpa [#allocation4], 0
    %s14 = scalar_lea.sflag [#allocation4], 1
    %15 = vsyncpa %s14, 0
    loop: start=0, step=1, limit=4
    $region2: #{tpu_custom_call.1} parent=1 // loop_pre_header
      _
    $region3: #{tpu_custom_call.1} parent=1 // loop_header
      %s17 = sphi 0, %s21
      %p18 = scmp.ge.s32.totalorder %s17, 4
      %s27 = sphi 0, %s29
      %s30 = sphi 0, %s27
      %s31 = sphi 0, %s30
      %s47 = sphi 0, %s31
      %s53 = sphi 0, %s55
      %s56 = sphi 0, %s53
      %s57 = sphi 0, %s56
      %s73 = sphi 0, %s57
      %s79 = sphi 0, %s81
      %s82 = sphi 0, %s79
      %s83 = sphi 0, %s82
      %s99 = sphi 0, %s83
    $region4: #{tpu_custom_call.1} parent=1 // loop_header_branch
      %20 = sbr.rel (%p18) target = $region8
    $region5: #{tpu_custom_call.1} parent=1 // loop_body
      %s22 = ssub.s32 %s17, 1
      %s23 = ssub.s32 %s17, 2
      %s24 = sadd.s32 %s17, 1
      %s25 = ssub.s32 %s17, %s24
      %p26 = scmp.eq.s32.totalorder %s25, 0
      %s28 = sadd.s32 %s27, 1
      %s29 = scalar_select %p26, %s27, %s28
      %p32 = pneg %p26
      %p33 = scmp.eq.s32.totalorder %s17, 1
      %p34 = por %p32, %p33
      %p35 = scmp.ne.s32.totalorder %s27, %s30
      %p36 = scmp.eq.s32.totalorder %s17, 0
      %p37 = por %p35, %p36
      %p38 = scmp.ne.s32.totalorder %s27, %s30
      %p39 = scmp.eq.s32.totalorder %s22, 1
      %p40 = por %p38, %p39
      %p41 = scmp.ne.s32.totalorder %s30, %s31
      %p42 = scmp.eq.s32.totalorder %s22, 0
      %p43 = por %p41, %p42
      %p44 = scmp.ne.s32.totalorder %s30, %s31
      %p45 = scmp.eq.s32.totalorder %s23, 1
      %p46 = por %p44, %p45
      %p48 = scmp.ne.s32.totalorder %s31, %s47
      %p49 = scmp.eq.s32.totalorder %s23, 0
      %p50 = por %p48, %p49
      %s51 = ssub.s32 %s17, %s24
      %p52 = scmp.eq.s32.totalorder %s51, 0
      %s54 = sadd.s32 %s53, 1
      %s55 = scalar_select %p52, %s53, %s54
      %p58 = pneg %p52
      %p59 = scmp.eq.s32.totalorder %s17, 1
      %p60 = por %p58, %p59
      %p61 = scmp.ne.s32.totalorder %s53, %s56
      %p62 = scmp.eq.s32.totalorder %s17, 0
      %p63 = por %p61, %p62
      %p64 = scmp.ne.s32.totalorder %s53, %s56
      %p65 = scmp.eq.s32.totalorder %s22, 1
      %p66 = por %p64, %p65
      %p67 = scmp.ne.s32.totalorder %s56, %s57
      %p68 = scmp.eq.s32.totalorder %s22, 0
      %p69 = por %p67, %p68
      %p70 = scmp.ne.s32.totalorder %s56, %s57
      %p71 = scmp.eq.s32.totalorder %s23, 1
      %p72 = por %p70, %p71
      %p74 = scmp.ne.s32.totalorder %s57, %s73
      %p75 = scmp.eq.s32.totalorder %s23, 0
      %p76 = por %p74, %p75
      %s77 = ssub.s32 %s17, %s24
      %p78 = scmp.eq.s32.totalorder %s77, 0
      %s80 = sadd.s32 %s79, 1
      %s81 = scalar_select %p78, %s79, %s80
      %p84 = pneg %p78
      %p85 = scmp.eq.s32.totalorder %s17, 1
      %p86 = por %p84, %p85
      %p87 = scmp.ne.s32.totalorder %s79, %s82
      %p88 = scmp.eq.s32.totalorder %s17, 0
      %p89 = por %p87, %p88
      %p90 = scmp.ne.s32.totalorder %s79, %s82
      %p91 = scmp.eq.s32.totalorder %s22, 1
      %p92 = por %p90, %p91
      %p93 = scmp.ne.s32.totalorder %s82, %s83
      %p94 = scmp.eq.s32.totalorder %s22, 0
      %p95 = por %p93, %p94
      %p96 = scmp.ne.s32.totalorder %s82, %s83
      %p97 = scmp.eq.s32.totalorder %s23, 1
      %p98 = por %p96, %p97
      %p100 = scmp.ne.s32.totalorder %s83, %s99
      %p101 = scmp.eq.s32.totalorder %s23, 0
      %p102 = por %p100, %p101
      %p103 = scmp.le.s32.totalorder 1, %s17
      %p104 = scmp.lt.s32.totalorder %s17, 3
      %p105 = pnand %p103, %p104
      %p106 = pneg %p105
      // Predicated region
      $region9: #{tpu_custom_call.1} parent=5 // pred_check
        _
      $region10: #{tpu_custom_call.1} parent=5 // pred_check_branch
        %108 = sbr.rel (%p105) target = $region12
      $region11: #{tpu_custom_call.1} parent=5 // pred_region
        %s109 = ssub.s32 %s17, 1
      $region12: #{tpu_custom_call.1} parent=5 // pred_fallthru
        _
      %p110 = scmp.lt.s32.totalorder %s17, 2
      // Predicated region
      $region13: #{tpu_custom_call.1} parent=5 // pred_check
        %p111 = pneg %p110
      $region14: #{tpu_custom_call.1} parent=5 // pred_check_branch
        %113 = sbr.rel (%p111) target = $region16
      $region15: #{tpu_custom_call.1} parent=5 // pred_region
        // Predicated region
        $region17: #{tpu_custom_call.1} parent=15 // pred_check
          %p114 = pneg %p37
        $region18: #{tpu_custom_call.1} parent=15 // pred_check_branch
          %116 = sbr.rel (%p114) target = $region20
        $region19: #{tpu_custom_call.1} parent=15 // pred_region
          %s117 = sand.u32 %s27, 1
          %s118 = scalar_lea.sflag [#allocation3], %s117
          %s119 = sand.u32 %s27, 1
          %s120 = smul.addr %s119, 4
          %s121 = scalar_lea.vmem [#allocation2], %s120
          %s123 = ssub.s32 64, 64
          %124 = vsyncadd %s118, %s123
          %s125 = smul.addr %s17, 64
          %s126 = scalar_lea.hbm %s0, %s125
          %s128 = sshll.u32 %s121, 4
          %s129 = int_to_ptr.vmem [resolvable:$true] %s128
          %131 = dma.hbm_to_vmem [thread:$0]  %s126, 64, %s129, %s118
        $region20: #{tpu_custom_call.1} parent=15 // pred_fallthru
          _
        // Predicated region
        $region21: #{tpu_custom_call.1} parent=15 // pred_check
          %p132 = pneg %p63
        $region22: #{tpu_custom_call.1} parent=15 // pred_check_branch
          %134 = sbr.rel (%p132) target = $region24
        $region23: #{tpu_custom_call.1} parent=15 // pred_region
          %s135 = sand.u32 %s53, 1
          %s136 = scalar_lea.sflag [#allocation6], %s135
          %s137 = sand.u32 %s53, 1
          %s138 = smul.addr %s137, 32
          %s139 = scalar_lea.vmem [#allocation5], %s138
          %s141 = ssub.s32 512, 512
          %142 = vsyncadd %s136, %s141
          %s143 = smul.addr %s17, 8
          %s144 = smul.addr %s143, 64
          %s145 = scalar_lea.hbm %s1, %s144
          %s146 = sshll.u32 %s139, 4
          %s147 = int_to_ptr.vmem [resolvable:$true] %s146
          %152 = dma.hbm_to_vmem [thread:$0]  %s145, 512, %s147, %s136, 64, 64, 4
        $region24: #{tpu_custom_call.1} parent=15 // pred_fallthru
          _
      $region16: #{tpu_custom_call.1} parent=5 // pred_fallthru
        _
      %p153 = scmp.le.s32.totalorder 1, %s17
      %p154 = scmp.lt.s32.totalorder %s17, 3
      %p155 = pnand %p153, %p154
      %p156 = pneg %p155
      // Predicated region
      $region25: #{tpu_custom_call.1} parent=5 // pred_check
        _
      $region26: #{tpu_custom_call.1} parent=5 // pred_check_branch
        %158 = sbr.rel (%p155) target = $region28
      $region27: #{tpu_custom_call.1} parent=5 // pred_region
        %s159 = ssub.s32 %s17, 1
        %s160 = sand.u32 %s30, 1
        %s161 = scalar_lea.sflag [#allocation3], %s160
        %s162 = sand.u32 %s30, 1
        %s163 = smul.addr %s162, 4
        %s164 = scalar_lea.vmem [#allocation2], %s163
        // Predicated region
        $region29: #{tpu_custom_call.1} parent=27 // pred_check
          %p165 = pneg %p43
        $region30: #{tpu_custom_call.1} parent=27 // pred_check_branch
          %167 = sbr.rel (%p165) target = $region32
        $region31: #{tpu_custom_call.1} parent=27 // pred_region
          %168 = dma.done %s161, 64
        $region32: #{tpu_custom_call.1} parent=27 // pred_fallthru
          _
        %s169 = sand.u32 %s56, 1
        %s170 = scalar_lea.sflag [#allocation6], %s169
        %s171 = sand.u32 %s56, 1
        %s172 = smul.addr %s171, 32
        %s173 = scalar_lea.vmem [#allocation5], %s172
        // Predicated region
        $region33: #{tpu_custom_call.1} parent=27 // pred_check
          %p174 = pneg %p69
        $region34: #{tpu_custom_call.1} parent=27 // pred_check_branch
          %176 = sbr.rel (%p174) target = $region36
        $region35: #{tpu_custom_call.1} parent=27 // pred_region
          %177 = dma.done %s170, 512
        $region36: #{tpu_custom_call.1} parent=27 // pred_fallthru
          _
        %s178 = sand.u32 %s30, 1
        %s179 = scalar_lea.sflag [#allocation3], %s178
        %s180 = sand.u32 %s30, 1
        %s181 = smul.addr %s180, 4
        %s182 = scalar_lea.vmem [#allocation2], %s181
        %p183 = pneg %p43
        %p184 = pneg %p40
        %s185 = sand.u32 %s56, 1
        %s186 = scalar_lea.sflag [#allocation6], %s185
        %s187 = sand.u32 %s56, 1
        %s188 = smul.addr %s187, 32
        %s189 = scalar_lea.vmem [#allocation5], %s188
        %p190 = pneg %p69
        %p191 = pneg %p66
        %p192 = pneg %p95
        %p193 = pneg %p92
        %s194 = sand.u32 %s82, 1
        %s195 = scalar_lea.sflag [#allocation4], %s194
        %s196 = sand.u32 %s82, 1
        %s197 = smul.addr %s196, 8
        %s198 = scalar_lea.vmem [#allocation7], %s197
        %v200 = vld [vmem:[%s164] sm:$0xf]
        %v201 = vld [vmem:[%s173] sm:$0xf]
        %v202 = vld [vmem:[%s173 + $0x4] sm:$0xf]
        %v203 = vld [vmem:[%s173 + $0x8] sm:$0xf]
        %v204 = vld [vmem:[%s173 + $0xc] sm:$0xf]
        %v205 = vld [vmem:[%s173 + $0x10] sm:$0xf]
        %v206 = vld [vmem:[%s173 + $0x14] sm:$0xf]
        %v207 = vld [vmem:[%s173 + $0x18] sm:$0xf]
        %v208 = vld [vmem:[%s173 + $0x1c] sm:$0xf]
        %v217 = vunpack.c.l.b16 %v201
        %v218 = vunpack.c.l.b16 %v202
        %v219 = vunpack.c.l.b16 %v203
        %v220 = vunpack.c.l.b16 %v204
        %v221 = vunpack.c.l.b16 %v205
        %v222 = vunpack.c.l.b16 %v206
        %v223 = vunpack.c.l.b16 %v207
        %v224 = vunpack.c.l.b16 %v208
        %v225 = vpack.c.b16 %v218, %v217
        %v226 = vpack.c.b16 %v220, %v219
        %v227 = vpack.c.b16 %v222, %v221
        %v228 = vpack.c.b16 %v224, %v223
        %vm233 = vcmask 523264
        %v235 = vsel %vm233, %v200, 0
        %237 = vmatprep.subr.bf16.mxu0 0
        %238 = vmatpush1.bf16.msra.mxu0 %v225
        %239 = vmatprep.subr.bf16.mxu0 0
        %240 = vmatpush1.bf16.msra.mxu0 %v226
        %241 = vmatprep.subr.bf16.mxu0 0
        %242 = vmatpush1.bf16.msra.mxu0 %v227
        %243 = vmatprep.subr.bf16.mxu0 0
        %244 = vmatpush1.bf16.msra.mxu0 %v228
        %245 = vmatprep.subr.bf16.mxu0 0
        %246 = vmatpush1.bf16.msra.mxu0 0
        %247 = vmatprep.subr.bf16.mxu0 0
        %248 = vmatpush1.bf16.msra.mxu0 0
        %249 = vmatprep.subr.bf16.mxu0 0
        %250 = vmatpush1.bf16.msra.mxu0 0
        %251 = vmatprep.subr.bf16.mxu0 0
        %252 = vmatpush1.bf16.msra.mxu0 0
        %253 = vmatprep.subr.bf16.mxu0 0
        %254 = vmatpush1.bf16.msra.mxu0 0
        %255 = vmatprep.subr.bf16.mxu0 0
        %256 = vmatpush1.bf16.msra.mxu0 0
        %257 = vmatprep.subr.bf16.mxu0 0
        %258 = vmatpush1.bf16.msra.mxu0 0
        %259 = vmatprep.subr.bf16.mxu0 0
        %260 = vmatpush1.bf16.msra.mxu0 0
        %261 = vmatprep.subr.bf16.mxu0 0
        %262 = vmatpush1.bf16.msra.mxu0 0
        %263 = vmatprep.subr.bf16.mxu0 0
        %264 = vmatpush1.bf16.msra.mxu0 0
        %265 = vmatprep.subr.bf16.mxu0 0
        %266 = vmatpush1.bf16.msra.mxu0 0
        %267 = vmatprep.subr.bf16.mxu0 0
        %268 = vmatpush1.bf16.msra.mxu0 0
        %269 = vmatprep.mubr.bf16.mxu0 0
        %270 = vmatmul.mubr.bf16.gmra.mrb[0].mxu0 %v235
        %v271 = vpop.f32.mrb[0].mxu0
        %v272 = vadd.f32 0.0, %v271
        %v273 = vpop.f32.mrb[0].mxu0
        %v274 = vpop.f32.mrb[0].mxu0
        %v275 = vpop.f32.mrb[0].mxu0
        %276 = vdwg.mxu0
        %277 = vst [vmem:[%s198] sm:$0xff] %v272
        %s278 = sand.u32 %s82, 1
        %s279 = scalar_lea.sflag [#allocation4], %s278
        %s280 = sand.u32 %s82, 1
        %s281 = smul.addr %s280, 8
        %s282 = scalar_lea.vmem [#allocation7], %s281
        // Predicated region
        $region37: #{tpu_custom_call.1} parent=27 // pred_check
          %p283 = pneg %p92
        $region38: #{tpu_custom_call.1} parent=27 // pred_check_branch
          %285 = sbr.rel (%p283) target = $region40
        $region39: #{tpu_custom_call.1} parent=27 // pred_region
          %s287 = ssub.s32 128, 128
          %288 = vsyncadd %s279, %s287
          %s289 = smul.addr %s22, 128
          %s290 = scalar_lea.hbm %s2, %s289
          %s292 = sshll.u32 %s282, 4
          %s293 = int_to_ptr.vmem [resolvable:$true] %s292
          %295 = dma.vmem_to_hbm [thread:$0]  %s293, 128, %s290, %s279
        $region40: #{tpu_custom_call.1} parent=27 // pred_fallthru
          _
      $region28: #{tpu_custom_call.1} parent=5 // pred_fallthru
        _
      %p296 = scmp.le.s32.totalorder 2, %s17
      // Predicated region
      $region41: #{tpu_custom_call.1} parent=5 // pred_check
        %p297 = pneg %p296
      $region42: #{tpu_custom_call.1} parent=5 // pred_check_branch
        %299 = sbr.rel (%p297) target = $region44
      $region43: #{tpu_custom_call.1} parent=5 // pred_region
        %s300 = ssub.s32 %s17, 2
        // Predicated region
        $region45: #{tpu_custom_call.1} parent=43 // pred_check
          %p301 = pneg %p98
        $region46: #{tpu_custom_call.1} parent=43 // pred_check_branch
          %303 = sbr.rel (%p301) target = $region48
        $region47: #{tpu_custom_call.1} parent=43 // pred_region
          %s304 = sand.u32 %s83, 1
          %s305 = scalar_lea.sflag [#allocation4], %s304
          %s306 = sand.u32 %s83, 1
          %s307 = smul.addr %s306, 8
          %s308 = scalar_lea.vmem [#allocation7], %s307
          %309 = dma.done %s305, 128
        $region48: #{tpu_custom_call.1} parent=43 // pred_fallthru
          _
      $region44: #{tpu_custom_call.1} parent=5 // pred_fallthru
        _
    $region6: #{tpu_custom_call.1} parent=1 // loop_footer
      %s21 = sadd.s32 1, %s17
    $region7: #{tpu_custom_call.1} parent=1 // loop_footer_branch
      %16 = sbr.rel target = $region3
    $region8: #{tpu_custom_call.1} parent=1 // loop_exit
      _
    %310 = vsyncpa [#allocation3], 1
    %s311 = scalar_lea.sflag [#allocation3], 1
    %312 = vsyncpa %s311, 1
    %313 = vsyncpa [#allocation6], 1
    %s314 = scalar_lea.sflag [#allocation6], 1
    %315 = vsyncpa %s314, 1
    %316 = vsyncpa [#allocation4], 1
    %s317 = scalar_lea.sflag [#allocation4], 1
    %318 = vsyncpa %s317, 1

</llo_original>
